<compile_context>
chip_gen: v7x
topology: tpu7x:2x2x1
jax: 0.10.0
libtpu: 0.0.40
codegen_flags: <defaults>
</compile_context>

<pallas_src>
import math

import jax
import jax.numpy as jnp
from jax.experimental import pallas as pl
from jax.experimental.pallas import tpu as pltpu


def _make_reward_kernel(num_hidden_layers, use_actions):
    """Builds the transposed-MLP kernel body (batch on the lane axis)."""

    def kernel(*refs):
        o_ref = refs[-1]
        refs = refs[:-1]
        idx = 0
        s_t = refs[idx][...]; idx += 1                       # [S, blk_b]
        if use_actions:
            a_t = refs[idx][...]; idx += 1                   # [A, blk_b]
        # Layer 1: split-input Linear (no concat), batch stays on lanes.
        h = jnp.dot(refs[idx][...], s_t,
                    preferred_element_type=jnp.float32); idx += 1
        if use_actions:
            h = h + jnp.dot(refs[idx][...], a_t,
                            preferred_element_type=jnp.float32); idx += 1
        h = jnp.maximum(h + refs[idx][...], 0.0); idx += 1   # + b1 [H,1], ReLU
        # Hidden layers 2..num_hidden_layers.
        for _ in range(num_hidden_layers - 1):
            h = jnp.dot(refs[idx][...], h,
                        preferred_element_type=jnp.float32); idx += 1
            h = jnp.maximum(h + refs[idx][...], 0.0); idx += 1
        # Output layer: [1, H] @ [H, blk_b] -> [1, blk_b] (lane-dense store).
        out = jnp.dot(refs[idx][...], h,
                      preferred_element_type=jnp.float32); idx += 1
        o_ref[...] = (out + refs[idx][0, 0]).astype(o_ref.dtype)

    return kernel


def init_reward_params(key, state_dim, action_dim=None, hidden_dim=128,
                       num_layers=2):
    """PyTorch nn.Linear-style uniform(+-1/sqrt(fan_in)) init.

    Weights are stored [in_features, out_features]; biases are [1, out_features].
    """
    input_dim = state_dim + (action_dim if action_dim else 0)
    dims = [(input_dim if i == 0 else hidden_dim, hidden_dim)
            for i in range(num_layers)]
    dims.append((hidden_dim, 1))
    params = []
    for fan_in, fan_out in dims:
        key, kw, kb = jax.random.split(key, 3)
        bound = 1.0 / math.sqrt(fan_in)
        w = jax.random.uniform(kw, (fan_in, fan_out), jnp.float32,
                               minval=-bound, maxval=bound)
        b = jax.random.uniform(kb, (1, fan_out), jnp.float32,
                               minval=-bound, maxval=bound)
        params.append((w, b))
    return params


def reward_forward_feature_major(states_fm, actions_fm, params, *,
                                 tile_b=16384, core_parallel=False):
    """Pallas reward MLP on feature-major inputs.

    Args:
      states_fm:  [state_dim, B] float32
      actions_fm: [action_dim, B] float32 or None
      params:     list of (W, b); W is [in, out], b is [1, out]
      tile_b:     batch tile (lanes per grid step); multiple of 128 when tiling
      core_parallel: set True on v7x to force the 2-TensorCore grid split
    Returns:
      rewards_row: [1, B] float32 (lane-dense; reshape to [B, 1] if needed).
    """
    w1, b1 = params[0]
    state_dim, B = states_fm.shape
    in_dim, H = w1.shape
    num_hidden = len(params) - 1
    use_actions = actions_fm is not None

    if use_actions:
        action_dim = actions_fm.shape[0]
        if in_dim != state_dim + action_dim:
            raise ValueError(
                f"W1 input dim {in_dim} != state_dim {state_dim} + "
                f"action_dim {action_dim}")
    else:
        action_dim = 0
        if in_dim != state_dim:
            raise ValueError(
                f"W1 input dim {in_dim} != state_dim {state_dim} "
                f"(network expects actions but none were provided)")

    # ---- batch tile sizing + explicit VMEM budget ---------------------------
    if B <= tile_b:
        blk_b = B
    else:
        assert tile_b % 128 == 0, "tile_b must be a multiple of 128"
        blk_b = tile_b

    # Streamed VMEM bytes per batch row: double-buffered inputs/output (f32)
    # plus ~two live [H, blk_b] f32 intermediates.
    per_row = 4 * (2 * (state_dim + action_dim + 1) + 2 * H)
    _VMEM_TARGET = 28 << 20          # keep streamed footprint under ~28 MiB
    while blk_b >= 2048 and per_row * blk_b > _VMEM_TARGET:
        blk_b = (blk_b // 2) // 128 * 128
    vmem_limit = int(min(max(per_row * blk_b + (6 << 20), 32 << 20), 48 << 20))

    grid = (pl.cdiv(B, blk_b),)

    def stream_spec(rows):           # lane-dense streamed operand
        return pl.BlockSpec((rows, blk_b), lambda i: (0, i))

    def const_spec(r, c):            # VMEM-resident operand (same block each step)
        return pl.BlockSpec((r, c), lambda i: (0, 0))

    ops, specs = [], []
    ops.append(states_fm.astype(jnp.float32))
    specs.append(stream_spec(state_dim))
    if use_actions:
        ops.append(actions_fm.astype(jnp.float32))
        specs.append(stream_spec(action_dim))
        ops.append(w1[:state_dim].T.astype(jnp.float32))   # [H, S]
        specs.append(const_spec(H, state_dim))
        ops.append(w1[state_dim:].T.astype(jnp.float32))   # [H, A]
        specs.append(const_spec(H, action_dim))
    else:
        ops.append(w1.T.astype(jnp.float32))               # [H, S]
        specs.append(const_spec(H, state_dim))
    ops.append(b1.reshape(H, 1).astype(jnp.float32))       # [H, 1]
    specs.append(const_spec(H, 1))
    for (w, b) in params[1:-1]:
        ops.append(w.T.astype(jnp.float32))                # [H, H]
        specs.append(const_spec(H, H))
        ops.append(b.reshape(H, 1).astype(jnp.float32))    # [H, 1]
        specs.append(const_spec(H, 1))
    w_out, b_out = params[-1]
    ops.append(w_out.reshape(1, H).astype(jnp.float32))    # [1, H]
    specs.append(const_spec(1, H))
    ops.append(jnp.asarray(b_out, jnp.float32).reshape(1, 1))  # scalar -> SMEM
    specs.append(pl.BlockSpec(memory_space=pltpu.MemorySpace.SMEM))

    out_shape = jax.ShapeDtypeStruct((1, B), jnp.float32)
    out_spec = pl.BlockSpec((1, blk_b), lambda i: (0, i))

    sem = pltpu.CORE_PARALLEL if core_parallel else pltpu.PARALLEL
    cparams = pltpu.CompilerParams(dimension_semantics=(sem,),
                                   vmem_limit_bytes=vmem_limit)

    kernel = _make_reward_kernel(num_hidden, use_actions)
    return pl.pallas_call(
        kernel,
        out_shape=out_shape,
        grid=grid,
        in_specs=specs,
        out_specs=out_spec,
        compiler_params=cparams,
    )(*ops)


def reward_forward(states, actions, params, *, tile_b=16384,
                   core_parallel=False):
    """PyTorch-layout entry point: states [B, S], actions [B, A] or None -> [B, 1]."""
    states = jnp.asarray(states, jnp.float32)
    B, state_dim = states.shape
    in_dim = params[0][0].shape[0]

    if in_dim > state_dim:                      # network was built with actions
        if actions is None:
            raise ValueError("this reward network expects actions")
        actions = jnp.asarray(actions, jnp.float32)
        if actions.shape != (B, in_dim - state_dim):
            raise ValueError(
                f"actions shape {actions.shape} inconsistent with W1 input dim "
                f"{in_dim} and state_dim {state_dim}")
        actions_fm = actions.T
    else:
        # PyTorch semantics: action_dim=None -> actions (if provided) are ignored.
        if actions is not None and jnp.asarray(actions).shape[0] != B:
            raise ValueError("actions batch dim mismatch")
        actions_fm = None

    # One-time relayout to feature-major so the kernel streams lane-dense blocks;
    # callers holding feature-major data should call reward_forward_feature_major
    # directly and skip this transpose.
    out_row = reward_forward_feature_major(
        states.T, actions_fm, params, tile_b=tile_b, core_parallel=core_parallel)

    # Module-faithful [B, 1] result (small relayout of B floats; consumers that
    # accept [1, B] should use the feature-major entry point instead).
    return out_row.reshape(B, 1)


def reward_forward_ref(states, actions, params):
    """Pure-JAX reference for correctness checking."""
    w1 = params[0][0]
    if actions is not None and w1.shape[0] > states.shape[-1]:
        x = jnp.concatenate([states, actions], axis=-1)
    else:
        x = states
    x = x.astype(jnp.float32)
    for (w, b) in params[:-1]:
        x = jnp.maximum(x @ w + b, 0.0)
    w, b = params[-1]
    return x @ w + b


if __name__ == "__main__":
    key = jax.random.PRNGKey(0)
    k_params, k_states, k_actions, k_big = jax.random.split(key, 4)

    # 1) Small state+action network (H=32, num_layers=2), single block.
    S, A, H = 12, 4, 32
    params = init_reward_params(k_params, S, A, hidden_dim=H, num_layers=2)
    states = jax.random.normal(k_states, (8, S), jnp.float32)
    actions = jax.random.normal(k_actions, (8, A), jnp.float32)
    r = jax.block_until_ready(reward_forward(states, actions, params))
    ref = reward_forward_ref(states, actions, params)
    assert r.shape == (8, 1), r.shape
    assert jnp.allclose(r, ref, atol=1e-4, rtol=1e-4), "mismatch (small s+a)"

    # 2) Multi-tile path with a non-divisible batch (partial last tile, masked store).
    big_b = 520
    s_big = jax.random.normal(k_big, (big_b, S), jnp.float32)
    a_big = jax.random.normal(jax.random.fold_in(k_big, 1), (big_b, A),
                              jnp.float32)
    r_big = jax.block_until_ready(
        reward_forward(s_big, a_big, params, tile_b=256))
    ref_big = reward_forward_ref(s_big, a_big, params)
    assert r_big.shape == (big_b, 1), r_big.shape
    assert jnp.allclose(r_big, ref_big, atol=1e-4, rtol=1e-4), "mismatch (tiled)"

    # 3) State-only network (actions=None path).
    params_s = init_reward_params(k_params, S, None, hidden_dim=H, num_layers=2)
    r_s = jax.block_until_ready(reward_forward(states, None, params_s))
    ref_s = reward_forward_ref(states, None, params_s)
    assert r_s.shape == (8, 1)
    assert jnp.allclose(r_s, ref_s, atol=1e-4, rtol=1e-4), "mismatch (state-only)"

    # 4) Module-default hidden_dim=128 with 3 hidden layers (generic depth).
    params_d = init_reward_params(jax.random.fold_in(k_params, 7), S, A,
                                  hidden_dim=128, num_layers=3)
    s_d = jax.random.normal(jax.random.fold_in(k_states, 7), (64, S), jnp.float32)
    a_d = jax.random.normal(jax.random.fold_in(k_actions, 7), (64, A), jnp.float32)
    r_d = jax.block_until_ready(reward_forward(s_d, a_d, params_d))
    ref_d = reward_forward_ref(s_d, a_d, params_d)
    assert r_d.shape == (64, 1)
    assert jnp.allclose(r_d, ref_d, atol=1e-4, rtol=1e-4), "mismatch (deep)"

    print("KERNEL_OK")
</pallas_src>

<mosaic_0001>
module attributes {stable_mosaic.version = 11 : i64} {
  func.func @kernel(%arg0: i32, %arg1: memref<12x8xf32, #tpu.memory_space<vmem>>, %arg2: memref<4x8xf32, #tpu.memory_space<vmem>>, %arg3: memref<32x12xf32, #tpu.memory_space<vmem>>, %arg4: memref<32x4xf32, #tpu.memory_space<vmem>>, %arg5: memref<32x1xf32, #tpu.memory_space<vmem>>, %arg6: memref<32x32xf32, #tpu.memory_space<vmem>>, %arg7: memref<32x1xf32, #tpu.memory_space<vmem>>, %arg8: memref<1x32xf32, #tpu.memory_space<vmem>>, %arg9: memref<1x1xf32, #tpu.memory_space<smem>>, %arg10: memref<1x8xf32, #tpu.memory_space<vmem>>) attributes {dimension_semantics = [#tpu.dimension_semantics<parallel>], iteration_bounds = array<i64: 1>, scalar_prefetch = 0 : i64, scratch_operands = 0 : i64, tpu.core_type = #tpu.core_type<tc>, window_params = [{transform_indices = @transform_0, window_bounds = array<i64: 12, 8>}, {transform_indices = @transform_1, window_bounds = array<i64: 4, 8>}, {pipeline_mode = #tpu.pipeline_mode<synchronous>, transform_indices = @transform_2, window_bounds = array<i64: 32, 12>}, {pipeline_mode = #tpu.pipeline_mode<synchronous>, transform_indices = @transform_3, window_bounds = array<i64: 32, 4>}, {pipeline_mode = #tpu.pipeline_mode<synchronous>, transform_indices = @transform_4, window_bounds = array<i64: 32, 1>}, {pipeline_mode = #tpu.pipeline_mode<synchronous>, transform_indices = @transform_5, window_bounds = array<i64: 32, 32>}, {pipeline_mode = #tpu.pipeline_mode<synchronous>, transform_indices = @transform_6, window_bounds = array<i64: 32, 1>}, {pipeline_mode = #tpu.pipeline_mode<synchronous>, transform_indices = @transform_7, window_bounds = array<i64: 1, 32>}, {transform_indices = @transform_8, window_bounds = array<i64: 1, 1>}, {transform_indices = @transform_9, window_bounds = array<i64: 1, 8>}]} {
    %c0 = arith.constant 0 : index
    %c0_0 = arith.constant 0 : index
    %0 = vector.load %arg1[%c0, %c0_0] : memref<12x8xf32, #tpu.memory_space<vmem>>, vector<12x8xf32>
    %c0_1 = arith.constant 0 : index
    %c0_2 = arith.constant 0 : index
    %1 = vector.load %arg2[%c0_1, %c0_2] : memref<4x8xf32, #tpu.memory_space<vmem>>, vector<4x8xf32>
    %c0_3 = arith.constant 0 : index
    %c0_4 = arith.constant 0 : index
    %2 = vector.load %arg3[%c0_3, %c0_4] : memref<32x12xf32, #tpu.memory_space<vmem>>, vector<32x12xf32>
    %cst = arith.constant dense<0.000000e+00> : vector<32x8xf32>
    %3 = tpu.matmul %2, %0, %cst {dimension_numbers = #tpu.dot_dimension_numbers<[1], [0], [0], [1], [0, 0, 1, 1], [], []>} : vector<32x12xf32>, vector<12x8xf32>, vector<32x8xf32> -> vector<32x8xf32>
    %c0_5 = arith.constant 0 : index
    %c0_6 = arith.constant 0 : index
    %4 = vector.load %arg4[%c0_5, %c0_6] : memref<32x4xf32, #tpu.memory_space<vmem>>, vector<32x4xf32>
    %cst_7 = arith.constant dense<0.000000e+00> : vector<32x8xf32>
    %5 = tpu.matmul %4, %1, %cst_7 {dimension_numbers = #tpu.dot_dimension_numbers<[1], [0], [0], [1], [0, 0, 1, 1], [], []>} : vector<32x4xf32>, vector<4x8xf32>, vector<32x8xf32> -> vector<32x8xf32>
    %6 = arith.addf %3, %5 : vector<32x8xf32>
    %c0_8 = arith.constant 0 : index
    %c0_9 = arith.constant 0 : index
    %7 = vector.load %arg5[%c0_8, %c0_9] : memref<32x1xf32, #tpu.memory_space<vmem>>, vector<32x1xf32>
    %8 = vector.broadcast %7 : vector<32x1xf32> to vector<32x8xf32>
    %9 = arith.addf %6, %8 : vector<32x8xf32>
    %cst_10 = arith.constant 0.000000e+00 : f32
    %10 = vector.broadcast %cst_10 : f32 to vector<32x8xf32>
    %11 = arith.maximumf %9, %10 : vector<32x8xf32>
    %c0_11 = arith.constant 0 : index
    %c0_12 = arith.constant 0 : index
    %12 = vector.load %arg6[%c0_11, %c0_12] : memref<32x32xf32, #tpu.memory_space<vmem>>, vector<32x32xf32>
    %cst_13 = arith.constant dense<0.000000e+00> : vector<32x8xf32>
    %13 = tpu.matmul %12, %11, %cst_13 {dimension_numbers = #tpu.dot_dimension_numbers<[1], [0], [0], [1], [0, 0, 1, 1], [], []>} : vector<32x32xf32>, vector<32x8xf32>, vector<32x8xf32> -> vector<32x8xf32>
    %c0_14 = arith.constant 0 : index
    %c0_15 = arith.constant 0 : index
    %14 = vector.load %arg7[%c0_14, %c0_15] : memref<32x1xf32, #tpu.memory_space<vmem>>, vector<32x1xf32>
    %15 = vector.broadcast %14 : vector<32x1xf32> to vector<32x8xf32>
    %16 = arith.addf %13, %15 : vector<32x8xf32>
    %cst_16 = arith.constant 0.000000e+00 : f32
    %17 = vector.broadcast %cst_16 : f32 to vector<32x8xf32>
    %18 = arith.maximumf %16, %17 : vector<32x8xf32>
    %c0_17 = arith.constant 0 : index
    %c0_18 = arith.constant 0 : index
    %19 = vector.load %arg8[%c0_17, %c0_18] : memref<1x32xf32, #tpu.memory_space<vmem>>, vector<1x32xf32>
    %cst_19 = arith.constant dense<0.000000e+00> : vector<1x8xf32>
    %20 = tpu.matmul %19, %18, %cst_19 {dimension_numbers = #tpu.dot_dimension_numbers<[1], [0], [0], [1], [0, 0, 1, 1], [], []>} : vector<1x32xf32>, vector<32x8xf32>, vector<1x8xf32> -> vector<1x8xf32>
    %c0_20 = arith.constant 0 : index
    %c0_21 = arith.constant 0 : index
    %21 = memref.load %arg9[%c0_20, %c0_21] : memref<1x1xf32, #tpu.memory_space<smem>>
    %22 = vector.broadcast %21 : f32 to vector<1x8xf32>
    %23 = arith.addf %20, %22 : vector<1x8xf32>
    %c0_22 = arith.constant 0 : index
    %c0_23 = arith.constant 0 : index
    %24 = vector.load %arg10[%c0_22, %c0_23] : memref<1x8xf32, #tpu.memory_space<vmem>>, vector<1x8xf32>
    tpu.vector_store %arg10[%c0_22, %c0_23], %23 {strides = array<i32>} : memref<1x8xf32, #tpu.memory_space<vmem>>, vector<1x8xf32>,
    return
  }
  func.func @transform_0(%arg0: i32) -> (i32, i32) {
    %c0_i32 = arith.constant 0 : i32
    %c0_i32_0 = arith.constant 0 : i32
    return %c0_i32, %arg0 : i32, i32
  }
  func.func @transform_1(%arg0: i32) -> (i32, i32) {
    %c0_i32 = arith.constant 0 : i32
    %c0_i32_0 = arith.constant 0 : i32
    return %c0_i32, %arg0 : i32, i32
  }
  func.func @transform_2(%arg0: i32) -> (i32, i32) {
    %c0_i32 = arith.constant 0 : i32
    %c0_i32_0 = arith.constant 0 : i32
    %c0_i32_1 = arith.constant 0 : i32
    return %c0_i32, %c0_i32_0 : i32, i32
  }
  func.func @transform_3(%arg0: i32) -> (i32, i32) {
    %c0_i32 = arith.constant 0 : i32
    %c0_i32_0 = arith.constant 0 : i32
    %c0_i32_1 = arith.constant 0 : i32
    return %c0_i32, %c0_i32_0 : i32, i32
  }
  func.func @transform_4(%arg0: i32) -> (i32, i32) {
    %c0_i32 = arith.constant 0 : i32
    %c0_i32_0 = arith.constant 0 : i32
    %c0_i32_1 = arith.constant 0 : i32
    return %c0_i32, %c0_i32_0 : i32, i32
  }
  func.func @transform_5(%arg0: i32) -> (i32, i32) {
    %c0_i32 = arith.constant 0 : i32
    %c0_i32_0 = arith.constant 0 : i32
    %c0_i32_1 = arith.constant 0 : i32
    return %c0_i32, %c0_i32_0 : i32, i32
  }
  func.func @transform_6(%arg0: i32) -> (i32, i32) {
    %c0_i32 = arith.constant 0 : i32
    %c0_i32_0 = arith.constant 0 : i32
    %c0_i32_1 = arith.constant 0 : i32
    return %c0_i32, %c0_i32_0 : i32, i32
  }
  func.func @transform_7(%arg0: i32) -> (i32, i32) {
    %c0_i32 = arith.constant 0 : i32
    %c0_i32_0 = arith.constant 0 : i32
    %c0_i32_1 = arith.constant 0 : i32
    return %c0_i32, %c0_i32_0 : i32, i32
  }
  func.func @transform_8(%arg0: i32) -> (i32, i32) {
    %c0_i32 = arith.constant 0 : i32
    %c0_i32_0 = arith.constant 0 : i32
    %c0_i32_1 = arith.constant 0 : i32
    return %c0_i32, %c0_i32_0 : i32, i32
  }
  func.func @transform_9(%arg0: i32) -> (i32, i32) {
    %c0_i32 = arith.constant 0 : i32
    %c0_i32_0 = arith.constant 0 : i32
    return %c0_i32, %arg0 : i32, i32
  }
}

</mosaic_0001>

<llo_original>
// kernel: tpu_custom_call.1
$region0: #{tpu_custom_call.1}
  #allocation0 [shape = 'u32[]', space=smem, size = 0x4, offset = 0x4, fixed_abs, tag = 'smem constant byte address 0x4 - core index']
  #allocation1 [shape = 'u32[144,128]{1,0:T(1,128)}', space=vmem, size = 0x12000, scoped, tag = 'internal scratch']
  #allocation2 [shape = 'f32[1,1]{1,0:T(1,128)S(6)}', space=smem, size = 0x200, scoped, tag = 'scoped memory for tpu_custom_call.1']
  %s0 = inlined_call_operand.vmem [shape: f32[12,8], index: 0, kind: input, shape index: {}]
  %s1 = inlined_call_operand.vmem [shape: f32[4,8], index: 1, kind: input, shape index: {}]
  %s2 = inlined_call_operand.vmem [shape: f32[32,12], index: 2, kind: input, shape index: {}]
  %s3 = inlined_call_operand.vmem [shape: f32[32,4], index: 3, kind: input, shape index: {}]
  %s4 = inlined_call_operand.vmem [shape: f32[32,1], index: 4, kind: input, shape index: {}]
  %s5 = inlined_call_operand.vmem [shape: f32[32,32], index: 5, kind: input, shape index: {}]
  %s6 = inlined_call_operand.vmem [shape: f32[32,1], index: 6, kind: input, shape index: {}]
  %s7 = inlined_call_operand.vmem [shape: f32[1,32], index: 7, kind: input, shape index: {}]
  %s8 = inlined_call_operand.<no memory space> [shape: f32[1,1], index: 8, kind: input, shape index: {}]
  %s9 = inlined_call_operand.hbm [shape: f32[1,8], index: 9, kind: output, shape index: {}]
  %s10 = sld [smem:[#allocation0]]
  $region46: #{tpu_custom_call.1} parent=0
    _
  %s12 = ssub.s32 1, %s10
  %s13 = scalar_select 0, %s12, %s10
  %14 = sst [smem:[#allocation2]] %s8
  $region1: #{tpu_custom_call.1} parent=0
    #allocation3 [shape = 'u8[512]{0}', space=vmem, size = 0x400, scoped, tag = 'output window, operand 0, single buffered']
    #allocation4 [shape = 's32[1]{0}', space=sflag, size = 0x4, scoped, tag = 'scoped memory for tpu_custom_call.1']
    %15 = vsyncpa [#allocation4], 0
    // Predicated region
    $region2: #{tpu_custom_call.1} parent=1 // pred_check
      _
    $region3: #{tpu_custom_call.1} parent=1 // pred_check_branch
      %17 = sbr.rel (0) target = $region5
    $region4: #{tpu_custom_call.1} parent=1 // pred_region
      _
    $region5: #{tpu_custom_call.1} parent=1 // pred_fallthru
      _
    // Predicated region
    $region6: #{tpu_custom_call.1} parent=1 // pred_check
      _
    $region7: #{tpu_custom_call.1} parent=1 // pred_check_branch
      %19 = sbr.rel (0) target = $region9
    $region8: #{tpu_custom_call.1} parent=1 // pred_region
      _
    $region9: #{tpu_custom_call.1} parent=1 // pred_fallthru
      _
    // Predicated region
    $region10: #{tpu_custom_call.1} parent=1 // pred_check
      _
    $region11: #{tpu_custom_call.1} parent=1 // pred_check_branch
      %21 = sbr.rel (0) target = $region13
    $region12: #{tpu_custom_call.1} parent=1 // pred_region
      _
    $region13: #{tpu_custom_call.1} parent=1 // pred_fallthru
      _
    // Predicated region
    $region14: #{tpu_custom_call.1} parent=1 // pred_check
      _
    $region15: #{tpu_custom_call.1} parent=1 // pred_check_branch
      %23 = sbr.rel (0) target = $region17
    $region16: #{tpu_custom_call.1} parent=1 // pred_region
      _
    $region17: #{tpu_custom_call.1} parent=1 // pred_fallthru
      _
    // Predicated region
    $region18: #{tpu_custom_call.1} parent=1 // pred_check
      _
    $region19: #{tpu_custom_call.1} parent=1 // pred_check_branch
      %25 = sbr.rel (0) target = $region21
    $region20: #{tpu_custom_call.1} parent=1 // pred_region
      _
    $region21: #{tpu_custom_call.1} parent=1 // pred_fallthru
      _
    // Predicated region
    $region22: #{tpu_custom_call.1} parent=1 // pred_check
      _
    $region23: #{tpu_custom_call.1} parent=1 // pred_check_branch
      %27 = sbr.rel (0) target = $region25
    $region24: #{tpu_custom_call.1} parent=1 // pred_region
      _
    $region25: #{tpu_custom_call.1} parent=1 // pred_fallthru
      _
    // Predicated region
    $region26: #{tpu_custom_call.1} parent=1 // pred_check
      _
    $region27: #{tpu_custom_call.1} parent=1 // pred_check_branch
      %29 = sbr.rel (0) target = $region29
    $region28: #{tpu_custom_call.1} parent=1 // pred_region
      _
    $region29: #{tpu_custom_call.1} parent=1 // pred_fallthru
      _
    // Predicated region
    $region30: #{tpu_custom_call.1} parent=1 // pred_check
      _
    $region31: #{tpu_custom_call.1} parent=1 // pred_check_branch
      %31 = sbr.rel (0) target = $region33
    $region32: #{tpu_custom_call.1} parent=1 // pred_region
      _
    $region33: #{tpu_custom_call.1} parent=1 // pred_fallthru
      _
    // Predicated region
    $region34: #{tpu_custom_call.1} parent=1 // pred_check
      _
    $region35: #{tpu_custom_call.1} parent=1 // pred_check_branch
      %33 = sbr.rel (0) target = $region37
    $region36: #{tpu_custom_call.1} parent=1 // pred_region
      _
    $region37: #{tpu_custom_call.1} parent=1 // pred_fallthru
      _
    %v34 = vld [vmem:[%s0] sm:$0xff]
    %v35 = vld [vmem:[%s0 + $0x8] sm:$0xf]
    %v36 = vld [vmem:[%s1] sm:$0xf]
    %v37 = vld [vmem:[%s2] sm:$0xff]
    %v38 = vld [vmem:[%s2 + $0x8] sm:$0xff]
    %v39 = vld [vmem:[%s2 + $0x10] sm:$0xff]
    %v40 = vld [vmem:[%s2 + $0x18] sm:$0xff]
    %v41 = vld [vmem:[%s3] sm:$0xff]
    %v42 = vld [vmem:[%s3 + $0x8] sm:$0xff]
    %v43 = vld [vmem:[%s3 + $0x10] sm:$0xff]
    %v44 = vld [vmem:[%s3 + $0x18] sm:$0xff]
    %vm45 = vcmask 31744
    %v47 = vsel %vm45, %v41, 0
    %v50 = vsel %vm45, %v42, 0
    %v53 = vsel %vm45, %v43, 0
    %v56 = vsel %vm45, %v44, 0
    %vm58 = vcmask 1043456
    %v60 = vsel %vm58, %v36, 0
    %62 = vmatprep.subr.mxu0 0.0
    %63 = vmatpush1.msra.mxu0 %v60
    %64 = vmatprep.subr.mxu0 0.0
    %65 = vmatpush1.msra.mxu0 0.0
    %66 = vmatprep.subr.mxu0 0.0
    %67 = vmatpush1.msra.mxu0 0.0
    %68 = vmatprep.subr.mxu0 0.0
    %69 = vmatpush1.msra.mxu0 0.0
    %70 = vmatprep.subr.mxu0 0.0
    %71 = vmatpush1.msra.mxu0 0.0
    %72 = vmatprep.subr.mxu0 0.0
    %73 = vmatpush1.msra.mxu0 0.0
    %74 = vmatprep.subr.mxu0 0.0
    %75 = vmatpush1.msra.mxu0 0.0
    %76 = vmatprep.subr.mxu0 0.0
    %77 = vmatpush1.msra.mxu0 0.0
    %78 = vmatprep.subr.mxu0 0.0
    %79 = vmatpush1.msra.mxu0 0.0
    %80 = vmatprep.subr.mxu0 0.0
    %81 = vmatpush1.msra.mxu0 0.0
    %82 = vmatprep.subr.mxu0 0.0
    %83 = vmatpush1.msra.mxu0 0.0
    %84 = vmatprep.subr.mxu0 0.0
    %85 = vmatpush1.msra.mxu0 0.0
    %86 = vmatprep.subr.mxu0 0.0
    %87 = vmatpush1.msra.mxu0 0.0
    %88 = vmatprep.subr.mxu0 0.0
    %89 = vmatpush1.msra.mxu0 0.0
    %90 = vmatprep.subr.mxu0 0.0
    %91 = vmatpush1.msra.mxu0 0.0
    %92 = vmatprep.subr.mxu0 0.0
    %93 = vmatpush1.msra.mxu0 0.0
    %94 = vmatprep.subr.mxu0 0.0
    %95 = vmatpush1.msra.mxu0 0.0
    %96 = vmatprep.subr.mxu0 0.0
    %97 = vmatpush1.msra.mxu0 0.0
    %98 = vmatprep.subr.mxu0 0.0
    %99 = vmatpush1.msra.mxu0 0.0
    %100 = vmatprep.subr.mxu0 0.0
    %101 = vmatpush1.msra.mxu0 0.0
    %102 = vmatprep.subr.mxu0 0.0
    %103 = vmatpush1.msra.mxu0 0.0
    %104 = vmatprep.subr.mxu0 0.0
    %105 = vmatpush1.msra.mxu0 0.0
    %106 = vmatprep.subr.mxu0 0.0
    %107 = vmatpush1.msra.mxu0 0.0
    %108 = vmatprep.subr.mxu0 0.0
    %109 = vmatpush1.msra.mxu0 0.0
    %110 = vmatprep.subr.mxu0 0.0
    %111 = vmatpush1.msra.mxu0 0.0
    %112 = vmatprep.subr.mxu0 0.0
    %113 = vmatpush1.msra.mxu0 0.0
    %114 = vmatprep.subr.mxu0 0.0
    %115 = vmatpush1.msra.mxu0 0.0
    %116 = vmatprep.subr.mxu0 0.0
    %117 = vmatpush1.msra.mxu0 0.0
    %118 = vmatprep.subr.mxu0 0.0
    %119 = vmatpush1.msra.mxu0 0.0
    %120 = vmatprep.subr.mxu0 0.0
    %121 = vmatpush1.msra.mxu0 0.0
    %122 = vmatprep.subr.mxu0 0.0
    %123 = vmatpush1.msra.mxu0 0.0
    %124 = vmatprep.subr.mxu0 0.0
    %125 = vmatpush1.msra.mxu0 0.0
    %126 = vmatprep.mubr.f32.mxu0 0.0
    %127 = vmatmul.mubr.f32.gmra.mrb[0].mxu0 %v47
    %v128 = vpop.f32.mrb[0].mxu0
    %v129 = vadd.f32 0.0, %v128
    %v130 = vpop.f32.mrb[0].mxu0
    %131 = vmatprep.mubr.f32.mxu0 0.0
    %132 = vmatmul.mubr.f32.gmra.mrb[0].mxu0 %v50
    %v133 = vpop.f32.mrb[0].mxu0
    %v134 = vadd.f32 0.0, %v133
    %v135 = vpop.f32.mrb[0].mxu0
    %136 = vmatprep.mubr.f32.mxu0 0.0
    %137 = vmatmul.mubr.f32.gmra.mrb[0].mxu0 %v53
    %v138 = vpop.f32.mrb[0].mxu0
    %v139 = vadd.f32 0.0, %v138
    %v140 = vpop.f32.mrb[0].mxu0
    %141 = vmatprep.mubr.f32.mxu0 0.0
    %142 = vmatmul.mubr.f32.gmra.mrb[0].mxu0 %v56
    %v143 = vpop.f32.mrb[0].mxu0
    %v144 = vadd.f32 0.0, %v143
    %v145 = vpop.f32.mrb[0].mxu0
    %146 = vdwg.mxu0
    %vm147 = vcmask 97280
    %v149 = vsel %vm147, %v37, 0
    %v152 = vsel %vm147, %v38, 0
    %v155 = vsel %vm147, %v39, 0
    %v158 = vsel %vm147, %v40, 0
    %v161 = vsel %vm58, %v35, 0
    %163 = vmatprep.subr.mxu0 0.0
    %164 = vmatpush1.msra.mxu0 %v34
    %165 = vmatprep.subr.mxu0 0.0
    %166 = vmatpush1.msra.mxu0 %v161
    %167 = vmatprep.subr.mxu0 0.0
    %168 = vmatpush1.msra.mxu0 0.0
    %169 = vmatprep.subr.mxu0 0.0
    %170 = vmatpush1.msra.mxu0 0.0
    %171 = vmatprep.subr.mxu0 0.0
    %172 = vmatpush1.msra.mxu0 0.0
    %173 = vmatprep.subr.mxu0 0.0
    %174 = vmatpush1.msra.mxu0 0.0
    %175 = vmatprep.subr.mxu0 0.0
    %176 = vmatpush1.msra.mxu0 0.0
    %177 = vmatprep.subr.mxu0 0.0
    %178 = vmatpush1.msra.mxu0 0.0
    %179 = vmatprep.subr.mxu0 0.0
    %180 = vmatpush1.msra.mxu0 0.0
    %181 = vmatprep.subr.mxu0 0.0
    %182 = vmatpush1.msra.mxu0 0.0
    %183 = vmatprep.subr.mxu0 0.0
    %184 = vmatpush1.msra.mxu0 0.0
    %185 = vmatprep.subr.mxu0 0.0
    %186 = vmatpush1.msra.mxu0 0.0
    %187 = vmatprep.subr.mxu0 0.0
    %188 = vmatpush1.msra.mxu0 0.0
    %189 = vmatprep.subr.mxu0 0.0
    %190 = vmatpush1.msra.mxu0 0.0
    %191 = vmatprep.subr.mxu0 0.0
    %192 = vmatpush1.msra.mxu0 0.0
    %193 = vmatprep.subr.mxu0 0.0
    %194 = vmatpush1.msra.mxu0 0.0
    %195 = vmatprep.subr.mxu0 0.0
    %196 = vmatpush1.msra.mxu0 0.0
    %197 = vmatprep.subr.mxu0 0.0
    %198 = vmatpush1.msra.mxu0 0.0
    %199 = vmatprep.subr.mxu0 0.0
    %200 = vmatpush1.msra.mxu0 0.0
    %201 = vmatprep.subr.mxu0 0.0
    %202 = vmatpush1.msra.mxu0 0.0
    %203 = vmatprep.subr.mxu0 0.0
    %204 = vmatpush1.msra.mxu0 0.0
    %205 = vmatprep.subr.mxu0 0.0
    %206 = vmatpush1.msra.mxu0 0.0
    %207 = vmatprep.subr.mxu0 0.0
    %208 = vmatpush1.msra.mxu0 0.0
    %209 = vmatprep.subr.mxu0 0.0
    %210 = vmatpush1.msra.mxu0 0.0
    %211 = vmatprep.subr.mxu0 0.0
    %212 = vmatpush1.msra.mxu0 0.0
    %213 = vmatprep.subr.mxu0 0.0
    %214 = vmatpush1.msra.mxu0 0.0
    %215 = vmatprep.subr.mxu0 0.0
    %216 = vmatpush1.msra.mxu0 0.0
    %217 = vmatprep.subr.mxu0 0.0
    %218 = vmatpush1.msra.mxu0 0.0
    %219 = vmatprep.subr.mxu0 0.0
    %220 = vmatpush1.msra.mxu0 0.0
    %221 = vmatprep.subr.mxu0 0.0
    %222 = vmatpush1.msra.mxu0 0.0
    %223 = vmatprep.subr.mxu0 0.0
    %224 = vmatpush1.msra.mxu0 0.0
    %225 = vmatprep.subr.mxu0 0.0
    %226 = vmatpush1.msra.mxu0 0.0
    %227 = vmatprep.mubr.f32.mxu0 0.0
    %228 = vmatmul.mubr.f32.gmra.mrb[0].mxu0 %v149
    %v229 = vpop.f32.mrb[0].mxu0
    %v230 = vadd.f32 %v129, %v229
    %v231 = vpop.f32.mrb[0].mxu0
    %232 = vmatprep.mubr.f32.mxu0 0.0
    %233 = vmatmul.mubr.f32.gmra.mrb[0].mxu0 %v152
    %v234 = vpop.f32.mrb[0].mxu0
    %v235 = vadd.f32 %v134, %v234
    %v236 = vpop.f32.mrb[0].mxu0
    %237 = vmatprep.mubr.f32.mxu0 0.0
    %238 = vmatmul.mubr.f32.gmra.mrb[0].mxu0 %v155
    %v239 = vpop.f32.mrb[0].mxu0
    %v240 = vadd.f32 %v139, %v239
    %v241 = vpop.f32.mrb[0].mxu0
    %242 = vmatprep.mubr.f32.mxu0 0.0
    %243 = vmatmul.mubr.f32.gmra.mrb[0].mxu0 %v158
    %v244 = vpop.f32.mrb[0].mxu0
    %v245 = vadd.f32 %v144, %v244
    %v246 = vpop.f32.mrb[0].mxu0
    %247 = vdwg.mxu0
    %v248 = vld [vmem:[%s4] sm:$0xff]
    %v249 = vld [vmem:[%s4 + $0x8] sm:$0xff]
    %v250 = vld [vmem:[%s4 + $0x10] sm:$0xff]
    %v251 = vld [vmem:[%s4 + $0x18] sm:$0xff]
    %253 = vset.pattern.permute.xlu0 0
    %254 = vperm.xlu0 %253, %v248
    %v255 = vpop.permute.xlu0 %254
    %258 = vset.pattern.permute.xlu0 0
    %259 = vperm.xlu0 %258, %v249
    %v260 = vpop.permute.xlu0 %259
    %263 = vset.pattern.permute.xlu0 0
    %264 = vperm.xlu0 %263, %v250
    %v265 = vpop.permute.xlu0 %264
    %268 = vset.pattern.permute.xlu0 0
    %269 = vperm.xlu0 %268, %v251
    %v270 = vpop.permute.xlu0 %269
    %v272 = vadd.f32 %v230, %v255
    %v273 = vadd.f32 %v235, %v260
    %v274 = vadd.f32 %v240, %v265
    %v275 = vadd.f32 %v245, %v270
    %v276 = vmax.f32 %v272, 0.0
    %v277 = vmax.f32 %v273, 0.0
    %v278 = vmax.f32 %v274, 0.0
    %v279 = vmax.f32 %v275, 0.0
    %v280 = vld [vmem:[%s5] sm:$0xff]
    %v281 = vld [vmem:[%s5 + $0x8] sm:$0xff]
    %v282 = vld [vmem:[%s5 + $0x10] sm:$0xff]
    %v283 = vld [vmem:[%s5 + $0x18] sm:$0xff]
    %v284 = vld [vmem:[%s6] sm:$0xff]
    %v285 = vld [vmem:[%s6 + $0x8] sm:$0xff]
    %v286 = vld [vmem:[%s6 + $0x10] sm:$0xff]
    %v287 = vld [vmem:[%s6 + $0x18] sm:$0xff]
    %289 = vset.pattern.permute.xlu0 0
    %290 = vperm.xlu0 %289, %v284
    %v291 = vpop.permute.xlu0 %290
    %294 = vset.pattern.permute.xlu0 0
    %295 = vperm.xlu0 %294, %v285
    %v296 = vpop.permute.xlu0 %295
    %299 = vset.pattern.permute.xlu0 0
    %300 = vperm.xlu0 %299, %v286
    %v301 = vpop.permute.xlu0 %300
    %304 = vset.pattern.permute.xlu0 0
    %305 = vperm.xlu0 %304, %v287
    %v306 = vpop.permute.xlu0 %305
    %vm308 = vcmask 261120
    %v310 = vsel %vm308, %v280, 0
    %v313 = vsel %vm308, %v281, 0
    %v316 = vsel %vm308, %v282, 0
    %v319 = vsel %vm308, %v283, 0
    %321 = vmatprep.subr.mxu0 0.0
    %322 = vmatpush1.msra.mxu0 %v276
    %323 = vmatprep.subr.mxu0 0.0
    %324 = vmatpush1.msra.mxu0 %v277
    %325 = vmatprep.subr.mxu0 0.0
    %326 = vmatpush1.msra.mxu0 %v278
    %327 = vmatprep.subr.mxu0 0.0
    %328 = vmatpush1.msra.mxu0 %v279
    %329 = vmatprep.subr.mxu0 0.0
    %330 = vmatpush1.msra.mxu0 0.0
    %331 = vmatprep.subr.mxu0 0.0
    %332 = vmatpush1.msra.mxu0 0.0
    %333 = vmatprep.subr.mxu0 0.0
    %334 = vmatpush1.msra.mxu0 0.0
    %335 = vmatprep.subr.mxu0 0.0
    %336 = vmatpush1.msra.mxu0 0.0
    %337 = vmatprep.subr.mxu0 0.0
    %338 = vmatpush1.msra.mxu0 0.0
    %339 = vmatprep.subr.mxu0 0.0
    %340 = vmatpush1.msra.mxu0 0.0
    %341 = vmatprep.subr.mxu0 0.0
    %342 = vmatpush1.msra.mxu0 0.0
    %343 = vmatprep.subr.mxu0 0.0
    %344 = vmatpush1.msra.mxu0 0.0
    %345 = vmatprep.subr.mxu0 0.0
    %346 = vmatpush1.msra.mxu0 0.0
    %347 = vmatprep.subr.mxu0 0.0
    %348 = vmatpush1.msra.mxu0 0.0
    %349 = vmatprep.subr.mxu0 0.0
    %350 = vmatpush1.msra.mxu0 0.0
    %351 = vmatprep.subr.mxu0 0.0
    %352 = vmatpush1.msra.mxu0 0.0
    %353 = vmatprep.subr.mxu0 0.0
    %354 = vmatpush1.msra.mxu0 0.0
    %355 = vmatprep.subr.mxu0 0.0
    %356 = vmatpush1.msra.mxu0 0.0
    %357 = vmatprep.subr.mxu0 0.0
    %358 = vmatpush1.msra.mxu0 0.0
    %359 = vmatprep.subr.mxu0 0.0
    %360 = vmatpush1.msra.mxu0 0.0
    %361 = vmatprep.subr.mxu0 0.0
    %362 = vmatpush1.msra.mxu0 0.0
    %363 = vmatprep.subr.mxu0 0.0
    %364 = vmatpush1.msra.mxu0 0.0
    %365 = vmatprep.subr.mxu0 0.0
    %366 = vmatpush1.msra.mxu0 0.0
    %367 = vmatprep.subr.mxu0 0.0
    %368 = vmatpush1.msra.mxu0 0.0
    %369 = vmatprep.subr.mxu0 0.0
    %370 = vmatpush1.msra.mxu0 0.0
    %371 = vmatprep.subr.mxu0 0.0
    %372 = vmatpush1.msra.mxu0 0.0
    %373 = vmatprep.subr.mxu0 0.0
    %374 = vmatpush1.msra.mxu0 0.0
    %375 = vmatprep.subr.mxu0 0.0
    %376 = vmatpush1.msra.mxu0 0.0
    %377 = vmatprep.subr.mxu0 0.0
    %378 = vmatpush1.msra.mxu0 0.0
    %379 = vmatprep.subr.mxu0 0.0
    %380 = vmatpush1.msra.mxu0 0.0
    %381 = vmatprep.subr.mxu0 0.0
    %382 = vmatpush1.msra.mxu0 0.0
    %383 = vmatprep.subr.mxu0 0.0
    %384 = vmatpush1.msra.mxu0 0.0
    %385 = vmatprep.mubr.f32.mxu0 0.0
    %386 = vmatmul.mubr.f32.gmra.mrb[0].mxu0 %v310
    %v387 = vpop.f32.mrb[0].mxu0
    %v388 = vadd.f32 %v291, %v387
    %v389 = vpop.f32.mrb[0].mxu0
    %390 = vmatprep.mubr.f32.mxu0 0.0
    %391 = vmatmul.mubr.f32.gmra.mrb[0].mxu0 %v313
    %v392 = vpop.f32.mrb[0].mxu0
    %v393 = vadd.f32 %v296, %v392
    %v394 = vpop.f32.mrb[0].mxu0
    %395 = vmatprep.mubr.f32.mxu0 0.0
    %396 = vmatmul.mubr.f32.gmra.mrb[0].mxu0 %v316
    %v397 = vpop.f32.mrb[0].mxu0
    %v398 = vadd.f32 %v301, %v397
    %v399 = vpop.f32.mrb[0].mxu0
    %400 = vmatprep.mubr.f32.mxu0 0.0
    %401 = vmatmul.mubr.f32.gmra.mrb[0].mxu0 %v319
    %v402 = vpop.f32.mrb[0].mxu0
    %v403 = vadd.f32 %v306, %v402
    %v404 = vpop.f32.mrb[0].mxu0
    %405 = vdwg.mxu0
    %v406 = vmax.f32 %v388, 0.0
    %v407 = vmax.f32 %v393, 0.0
    %v408 = vmax.f32 %v398, 0.0
    %v409 = vmax.f32 %v403, 0.0
    %v410 = vld [vmem:[%s7] sm:$0x1]
    %s411 = sld [smem:[#allocation2]]
    %v412 = vstv %s411
    %v414 = vsel %vm308, %v410, 0
    %416 = vmatprep.subr.mxu0 0.0
    %417 = vmatpush1.msra.mxu0 %v406
    %418 = vmatprep.subr.mxu0 0.0
    %419 = vmatpush1.msra.mxu0 %v407
    %420 = vmatprep.subr.mxu0 0.0
    %421 = vmatpush1.msra.mxu0 %v408
    %422 = vmatprep.subr.mxu0 0.0
    %423 = vmatpush1.msra.mxu0 %v409
    %424 = vmatprep.subr.mxu0 0.0
    %425 = vmatpush1.msra.mxu0 0.0
    %426 = vmatprep.subr.mxu0 0.0
    %427 = vmatpush1.msra.mxu0 0.0
    %428 = vmatprep.subr.mxu0 0.0
    %429 = vmatpush1.msra.mxu0 0.0
    %430 = vmatprep.subr.mxu0 0.0
    %431 = vmatpush1.msra.mxu0 0.0
    %432 = vmatprep.subr.mxu0 0.0
    %433 = vmatpush1.msra.mxu0 0.0
    %434 = vmatprep.subr.mxu0 0.0
    %435 = vmatpush1.msra.mxu0 0.0
    %436 = vmatprep.subr.mxu0 0.0
    %437 = vmatpush1.msra.mxu0 0.0
    %438 = vmatprep.subr.mxu0 0.0
    %439 = vmatpush1.msra.mxu0 0.0
    %440 = vmatprep.subr.mxu0 0.0
    %441 = vmatpush1.msra.mxu0 0.0
    %442 = vmatprep.subr.mxu0 0.0
    %443 = vmatpush1.msra.mxu0 0.0
    %444 = vmatprep.subr.mxu0 0.0
    %445 = vmatpush1.msra.mxu0 0.0
    %446 = vmatprep.subr.mxu0 0.0
    %447 = vmatpush1.msra.mxu0 0.0
    %448 = vmatprep.subr.mxu0 0.0
    %449 = vmatpush1.msra.mxu0 0.0
    %450 = vmatprep.subr.mxu0 0.0
    %451 = vmatpush1.msra.mxu0 0.0
    %452 = vmatprep.subr.mxu0 0.0
    %453 = vmatpush1.msra.mxu0 0.0
    %454 = vmatprep.subr.mxu0 0.0
    %455 = vmatpush1.msra.mxu0 0.0
    %456 = vmatprep.subr.mxu0 0.0
    %457 = vmatpush1.msra.mxu0 0.0
    %458 = vmatprep.subr.mxu0 0.0
    %459 = vmatpush1.msra.mxu0 0.0
    %460 = vmatprep.subr.mxu0 0.0
    %461 = vmatpush1.msra.mxu0 0.0
    %462 = vmatprep.subr.mxu0 0.0
    %463 = vmatpush1.msra.mxu0 0.0
    %464 = vmatprep.subr.mxu0 0.0
    %465 = vmatpush1.msra.mxu0 0.0
    %466 = vmatprep.subr.mxu0 0.0
    %467 = vmatpush1.msra.mxu0 0.0
    %468 = vmatprep.subr.mxu0 0.0
    %469 = vmatpush1.msra.mxu0 0.0
    %470 = vmatprep.subr.mxu0 0.0
    %471 = vmatpush1.msra.mxu0 0.0
    %472 = vmatprep.subr.mxu0 0.0
    %473 = vmatpush1.msra.mxu0 0.0
    %474 = vmatprep.subr.mxu0 0.0
    %475 = vmatpush1.msra.mxu0 0.0
    %476 = vmatprep.subr.mxu0 0.0
    %477 = vmatpush1.msra.mxu0 0.0
    %478 = vmatprep.subr.mxu0 0.0
    %479 = vmatpush1.msra.mxu0 0.0
    %480 = vmatprep.mubr.f32.mxu0 0.0
    %481 = vmatmul.mubr.f32.gmra.mrb[0].mxu0 %v414
    %v482 = vpop.f32.mrb[0].mxu0
    %v483 = vadd.f32 %v412, %v482
    %v484 = vpop.f32.mrb[0].mxu0
    %485 = vdwg.mxu0
    %vm486 = vcmask 57344
    %487 = vst.msk [vmem:[#allocation3] sm:$0x1] %vm486, %v483
    // Predicated region
    $region38: #{tpu_custom_call.1} parent=1 // pred_check
      _
    $region39: #{tpu_custom_call.1} parent=1 // pred_check_branch
      %489 = sbr.rel (0) target = $region41
    $region40: #{tpu_custom_call.1} parent=1 // pred_region
      %s491 = ssub.s32 16, 16
      %492 = vsyncadd [#allocation4], %s491
      %s494 = sshll.u32 [#allocation3], 4
      %s495 = int_to_ptr.vmem [resolvable:$true] %s494
      %497 = dma.vmem_to_hbm [thread:$0]  %s495, 16, %s9, [#allocation4]
    $region41: #{tpu_custom_call.1} parent=1 // pred_fallthru
      _
    // Predicated region
    $region42: #{tpu_custom_call.1} parent=1 // pred_check
      _
    $region43: #{tpu_custom_call.1} parent=1 // pred_check_branch
      %499 = sbr.rel (0) target = $region45
    $region44: #{tpu_custom_call.1} parent=1 // pred_region
      %500 = dma.done [#allocation4], 16
    $region45: #{tpu_custom_call.1} parent=1 // pred_fallthru
      _
    %501 = vsyncpa [#allocation4], 1

</llo_original>
